<compile_context>
chip_gen: v7x
topology: tpu7x:2x2x1
jax: 0.10.0
libtpu: 0.0.40
codegen_flags: <defaults>
</compile_context>

<pallas_src>
import functools
import math

import jax
import jax.numpy as jnp
from jax.experimental import pallas as pl
from jax.experimental.pallas import tpu as pltpu


_INV_SQRT2 = 1.0 / math.sqrt(2.0)


def _gelu_exact(h):
    # Exact (erf-based) GELU, matching torch.nn.GELU() default.
    return 0.5 * h * (1.0 + jax.lax.erf(h * _INV_SQRT2))


# ---------------------------------------------------------------------------
# Kernel bodies
# ---------------------------------------------------------------------------
def _ffn_kernel(x_ref, w1_ref, b1_ref, w2_ref, b2_ref, o_ref):
    """Resident-weight path: whole hidden axis in VMEM, fully fused."""
    x = x_ref[...]
    h = jnp.dot(x, w1_ref[...], preferred_element_type=jnp.float32)
    h = _gelu_exact(h + b1_ref[...])
    out = jnp.dot(h.astype(w2_ref.dtype), w2_ref[...],
                  preferred_element_type=jnp.float32)
    o_ref[...] = (out + b2_ref[...]).astype(o_ref.dtype)


def _ffn_kernel_htiled(x_ref, w1_ref, b1_ref, w2_ref, b2_ref, o_ref, acc_ref):
    """Hidden-axis-tiled path (grid axis 1): f32 accumulator + epilogue."""
    j = pl.program_id(1)

    @pl.when(j == 0)
    def _():
        acc_ref[...] = jnp.zeros_like(acc_ref)

    h = jnp.dot(x_ref[...], w1_ref[...], preferred_element_type=jnp.float32)
    h = _gelu_exact(h + b1_ref[...])
    acc_ref[...] += jnp.dot(h.astype(w2_ref.dtype), w2_ref[...],
                            preferred_element_type=jnp.float32)

    @pl.when(j == pl.num_programs(1) - 1)
    def _():
        o_ref[...] = (acc_ref[...] + b2_ref[...]).astype(o_ref.dtype)


# ---------------------------------------------------------------------------
# Tiling / VMEM heuristics
# ---------------------------------------------------------------------------
def _round_up(v, mult):
    return -(-v // mult) * mult


def _vmem_limit_and_budget():
    """Returns (scoped-VMEM limit to request, byte budget for tile sizing)."""
    cap = 0
    try:
        cap = int(getattr(pltpu.get_tpu_info(), "vmem_capacity_bytes", 0))
    except Exception:  # query unavailable (e.g. interpret mode)
        cap = 0
    if cap <= 0:
        cap = 64 << 20  # conservative default: v7x physical VMEM per TC
    # Request at most 3/4 of physical VMEM (headroom for Mosaic internal
    # scratch / pipeline bookkeeping), never below the 32 MiB default scope.
    limit = max(32 << 20, min((cap * 3) // 4, 96 << 20))
    budget = limit - (8 << 20)  # sizing headroom under the requested limit
    return limit, budget


_TM_CANDIDATES = (4096, 2048, 1024, 512, 256, 128, 64, 32, 16, 8)


def _resident_bytes(dim, hidden, in_bytes):
    # Weights/biases are VMEM-resident and single-buffered (pl.Buffered(1)).
    return in_bytes * (dim * hidden + hidden * dim) + 4 * (hidden + dim)


def _tile_bytes(tm, dim, hidden, in_bytes):
    return (2 * tm * dim * in_bytes   # x tile (double-buffered)
            + 2 * tm * dim * 4        # out tile (double-buffered, <= f32)
            + tm * hidden * 4         # f32 hidden intermediate
            + tm * dim * 4)           # f32 output intermediate before cast


def _choose_tm(m, dim, hidden, in_bytes, budget):
    """Row tile for the resident path, or None if the weights don't fit."""
    w_bytes = _resident_bytes(dim, hidden, in_bytes)
    if w_bytes + _tile_bytes(8, dim, hidden, in_bytes) > budget:
        return None  # weights too big to stay resident -> hidden-tiled path
    m8 = _round_up(m, 8)
    # Single grid step if everything fits: no padding (block == full array),
    # no per-step overhead.  The right answer for small configs.
    if w_bytes + _tile_bytes(m8, dim, hidden, in_bytes) <= budget:
        return m
    fitting = [t for t in _TM_CANDIDATES
               if w_bytes + _tile_bytes(t, dim, hidden, in_bytes) <= budget]
    for t in fitting:  # prefer a divisor of M: avoids the wrapper-side pad
        if m % t == 0:
            return t
    return fitting[0]


def _choose_tiles_htiled(m, dim, hidden, in_bytes, budget):
    """(tm, th) for the hidden-tiled path."""
    m8 = _round_up(m, 8)
    h128 = _round_up(hidden, 128)
    for tm in (1024, 512, 256, 128, 64, 32, 16, 8):
        tm_c = min(tm, m8)
        for th in (4096, 2048, 1024, 512, 256, 128):
            th_c = min(th, h128)
            per_step = (2 * tm_c * dim * in_bytes     # x tile
                        + 2 * dim * th_c * in_bytes   # w1 slice
                        + 2 * th_c * 4                # b1 slice
                        + 2 * th_c * dim * in_bytes   # w2 slice
                        + dim * 4                     # b2 (resident, single)
                        + 2 * tm_c * dim * 4          # out tile
                        + tm_c * dim * 4              # acc scratch
                        + tm_c * th_c * 4)            # f32 hidden slab
            if per_step <= budget:
                return tm_c, th_c
    return 8, 128


# ---------------------------------------------------------------------------
# Public wrapper
# ---------------------------------------------------------------------------
def feed_forward(x, w1, b1, w2, b2, *, compute_dtype=None, tm=None, th=None):
    """Fused FeedForward: Linear -> GELU(exact) -> Linear (dropout p=0).

    Args:
      x:  (..., dim)
      w1: (dim, hidden)   -- transposed PyTorch weight of Linear(dim, hidden)
      b1: (hidden,)
      w2: (hidden, dim)   -- transposed PyTorch weight of Linear(hidden, dim)
      b2: (dim,)
      compute_dtype: optional dtype (e.g. jnp.bfloat16) for the MXU operands
        x/w1/w2 (accumulation stays f32).  Faster on v6e/v7x, looser numerics.
      tm: optional row-tile override.
      th: optional hidden-tile override (forces the hidden-tiled path).
    Returns:
      (..., dim) array in x's original dtype.
    """
    orig_shape = x.shape
    dim = orig_shape[-1]
    hidden = w1.shape[1]
    out_dtype = x.dtype

    m = math.prod(orig_shape[:-1]) if len(orig_shape) > 1 else 1
    x2d = x.reshape(m, dim)

    if compute_dtype is not None:
        x2d = x2d.astype(compute_dtype)
        w1 = w1.astype(compute_dtype)
        w2 = w2.astype(compute_dtype)
    in_bytes = x2d.dtype.itemsize

    b1_2d = b1.reshape(1, hidden).astype(jnp.float32)
    b2_2d = b2.reshape(1, dim).astype(jnp.float32)

    vmem_limit, budget = _vmem_limit_and_budget()

    cost = pl.CostEstimate(
        flops=4 * m * dim * hidden,
        transcendentals=m * hidden,
        bytes_accessed=(m * dim * in_bytes
                        + 2 * dim * hidden * in_bytes
                        + (hidden + dim) * 4
                        + m * dim * jnp.dtype(out_dtype).itemsize),
    )

    use_htiled = th is not None
    if not use_htiled and tm is None:
        tm = _choose_tm(m, dim, hidden, in_bytes, budget)
        use_htiled = tm is None

    # Constant-index_map operands: VMEM-resident, single-buffered.
    resident = functools.partial(pl.BlockSpec, pipeline_mode=pl.Buffered(1))

    if not use_htiled:
        # ------------------------- resident-weight path -------------------
        m_pad = _round_up(m, tm)
        if m_pad != m:
            x2d = jnp.pad(x2d, ((0, m_pad - m), (0, 0)))

        out2d = pl.pallas_call(
            _ffn_kernel,
            out_shape=jax.ShapeDtypeStruct((m_pad, dim), out_dtype),
            grid=(m_pad // tm,),
            in_specs=[
                pl.BlockSpec((tm, dim), lambda i: (i, 0)),   # x: M-tiled
                resident((dim, hidden), lambda i: (0, 0)),   # w1
                resident((1, hidden), lambda i: (0, 0)),     # b1
                resident((hidden, dim), lambda i: (0, 0)),   # w2
                resident((1, dim), lambda i: (0, 0)),        # b2
            ],
            out_specs=pl.BlockSpec((tm, dim), lambda i: (i, 0)),
            compiler_params=pltpu.CompilerParams(
                dimension_semantics=("parallel",),  # megacore row-tile shard
                vmem_limit_bytes=vmem_limit),
            cost_estimate=cost,
        )(x2d, w1, b1_2d, w2, b2_2d)
    else:
        # ------------------------- hidden-tiled path ----------------------
        if tm is None or th is None:
            tm_auto, th_auto = _choose_tiles_htiled(m, dim, hidden, in_bytes,
                                                    budget)
            tm = tm if tm is not None else tm_auto
            th = th if th is not None else th_auto

        m_pad = _round_up(m, tm)
        if m_pad != m:
            x2d = jnp.pad(x2d, ((0, m_pad - m), (0, 0)))
        h_pad = _round_up(hidden, th)
        if h_pad != hidden:
            # Zero-padded hidden columns are exact: GELU(0)=0 contributes 0.
            w1 = jnp.pad(w1, ((0, 0), (0, h_pad - hidden)))
            b1_2d = jnp.pad(b1_2d, ((0, 0), (0, h_pad - hidden)))
            w2 = jnp.pad(w2, ((0, h_pad - hidden), (0, 0)))

        out2d = pl.pallas_call(
            _ffn_kernel_htiled,
            out_shape=jax.ShapeDtypeStruct((m_pad, dim), out_dtype),
            grid=(m_pad // tm, h_pad // th),
            in_specs=[
                pl.BlockSpec((tm, dim), lambda i, j: (i, 0)),   # x
                pl.BlockSpec((dim, th), lambda i, j: (0, j)),   # w1 slice
                pl.BlockSpec((1, th), lambda i, j: (0, j)),     # b1 slice
                pl.BlockSpec((th, dim), lambda i, j: (j, 0)),   # w2 slice
                resident((1, dim), lambda i, j: (0, 0)),        # b2 resident
            ],
            out_specs=pl.BlockSpec((tm, dim), lambda i, j: (i, 0)),
            scratch_shapes=[pltpu.VMEM((tm, dim), jnp.float32)],
            compiler_params=pltpu.CompilerParams(
                dimension_semantics=("parallel", "arbitrary"),
                vmem_limit_bytes=vmem_limit),
            cost_estimate=cost,
        )(x2d, w1, b1_2d, w2, b2_2d)

    if m_pad != m:
        out2d = out2d[:m]
    return out2d.reshape(orig_shape)


def _reference(x, w1, b1, w2, b2):
    h = x @ w1 + b1
    h = _gelu_exact(h)
    return h @ w2 + b2


if __name__ == "__main__":
    # Module config: dim=32, hidden_dim=64, dropout=0.0
    batch, seq, dim, hidden = 2, 8, 32, 64

    key = jax.random.PRNGKey(0)
    kx, kw1, kb1, kw2, kb2 = jax.random.split(key, 5)

    x = jax.random.normal(kx, (batch, seq, dim), dtype=jnp.float32)

    # Deterministic init mimicking torch.nn.Linear (uniform +/- 1/sqrt(fan_in)).
    lim1 = 1.0 / math.sqrt(dim)
    lim2 = 1.0 / math.sqrt(hidden)
    w1 = jax.random.uniform(kw1, (dim, hidden), jnp.float32, -lim1, lim1)
    b1 = jax.random.uniform(kb1, (hidden,), jnp.float32, -lim1, lim1)
    w2 = jax.random.uniform(kw2, (hidden, dim), jnp.float32, -lim2, lim2)
    b2 = jax.random.uniform(kb2, (dim,), jnp.float32, -lim2, lim2)

    ref = _reference(x, w1, b1, w2, b2)

    # 1) f32 resident-weight path (single grid step, no pad at this size):
    #    must match the PyTorch module numerics tightly.
    out = jax.block_until_ready(jax.jit(feed_forward)(x, w1, b1, w2, b2))
    assert out.shape == (batch, seq, dim)
    assert jnp.allclose(out, ref, atol=1e-5, rtol=1e-5)

    # 2) bf16-operand path (v6e/v7x MXU-friendly); f32 accumulation.
    ffn_bf16 = jax.jit(functools.partial(feed_forward,
                                         compute_dtype=jnp.bfloat16))
    out_bf16 = jax.block_until_ready(ffn_bf16(x, w1, b1, w2, b2))
    assert out_bf16.shape == (batch, seq, dim)
    assert jnp.allclose(out_bf16, ref, atol=1e-1, rtol=1e-1)

    # 3) Hidden-axis-tiled fallback (used when weights exceed the VMEM
    #    budget), exercised here at small shapes by forcing tm/th.
    hidden_big = 256
    kw1b, kb1b, kw2b, kb2b = jax.random.split(kw2, 4)
    lim1b = 1.0 / math.sqrt(dim)
    lim2b = 1.0 / math.sqrt(hidden_big)
    w1b = jax.random.uniform(kw1b, (dim, hidden_big), jnp.float32, -lim1b, lim1b)
    b1b = jax.random.uniform(kb1b, (hidden_big,), jnp.float32, -lim1b, lim1b)
    w2b = jax.random.uniform(kw2b, (hidden_big, dim), jnp.float32, -lim2b, lim2b)
    b2b = jax.random.uniform(kb2b, (dim,), jnp.float32, -lim2b, lim2b)
    ref_b = _reference(x, w1b, b1b, w2b, b2b)
    ffn_tiled = jax.jit(functools.partial(feed_forward, tm=8, th=128))
    out_b = jax.block_until_ready(ffn_tiled(x, w1b, b1b, w2b, b2b))
    assert out_b.shape == (batch, seq, dim)
    assert jnp.allclose(out_b, ref_b, atol=1e-4, rtol=1e-4)

    print("KERNEL_OK")
</pallas_src>

<mosaic_0001>
module attributes {stable_mosaic.version = 11 : i64} {
  func.func @_ffn_kernel(%arg0: i32, %arg1: memref<16x32xf32, #tpu.memory_space<vmem>>, %arg2: memref<32x64xf32, #tpu.memory_space<vmem>>, %arg3: memref<1x64xf32, #tpu.memory_space<vmem>>, %arg4: memref<64x32xf32, #tpu.memory_space<vmem>>, %arg5: memref<1x32xf32, #tpu.memory_space<vmem>>, %arg6: memref<16x32xf32, #tpu.memory_space<vmem>>) attributes {dimension_semantics = [#tpu.dimension_semantics<parallel>], iteration_bounds = array<i64: 1>, scalar_prefetch = 0 : i64, scratch_operands = 0 : i64, tpu.core_type = #tpu.core_type<tc>, window_params = [{transform_indices = @transform_0, window_bounds = array<i64: 16, 32>}, {pipeline_mode = #tpu.pipeline_mode<synchronous>, transform_indices = @transform_1, window_bounds = array<i64: 32, 64>}, {pipeline_mode = #tpu.pipeline_mode<synchronous>, transform_indices = @transform_2, window_bounds = array<i64: 1, 64>}, {pipeline_mode = #tpu.pipeline_mode<synchronous>, transform_indices = @transform_3, window_bounds = array<i64: 64, 32>}, {pipeline_mode = #tpu.pipeline_mode<synchronous>, transform_indices = @transform_4, window_bounds = array<i64: 1, 32>}, {transform_indices = @transform_5, window_bounds = array<i64: 16, 32>}]} {
    %c0 = arith.constant 0 : index
    %c0_0 = arith.constant 0 : index
    %0 = vector.load %arg1[%c0, %c0_0] : memref<16x32xf32, #tpu.memory_space<vmem>>, vector<16x32xf32>
    %c0_1 = arith.constant 0 : index
    %c0_2 = arith.constant 0 : index
    %1 = vector.load %arg2[%c0_1, %c0_2] : memref<32x64xf32, #tpu.memory_space<vmem>>, vector<32x64xf32>
    %cst = arith.constant dense<0.000000e+00> : vector<16x64xf32>
    %2 = tpu.matmul %0, %1, %cst {dimension_numbers = #tpu.dot_dimension_numbers<[1], [0], [0], [1], [0, 0, 1, 1], [], []>} : vector<16x32xf32>, vector<32x64xf32>, vector<16x64xf32> -> vector<16x64xf32>
    %c0_3 = arith.constant 0 : index
    %c0_4 = arith.constant 0 : index
    %3 = vector.load %arg3[%c0_3, %c0_4] : memref<1x64xf32, #tpu.memory_space<vmem>>, vector<1x64xf32>
    %4 = vector.broadcast %3 : vector<1x64xf32> to vector<16x64xf32>
    %5 = arith.addf %2, %4 : vector<16x64xf32>
    %cst_5 = arith.constant 5.000000e-01 : f32
    %6 = vector.broadcast %cst_5 : f32 to vector<16x64xf32>
    %7 = arith.mulf %6, %5 : vector<16x64xf32>
    %cst_6 = arith.constant 0.707106769 : f32
    %8 = vector.broadcast %cst_6 : f32 to vector<16x64xf32>
    %9 = arith.mulf %5, %8 : vector<16x64xf32>
    %10 = math.erf %9 : vector<16x64xf32>
    %cst_7 = arith.constant 1.000000e+00 : f32
    %11 = vector.broadcast %cst_7 : f32 to vector<16x64xf32>
    %12 = arith.addf %11, %10 : vector<16x64xf32>
    %13 = arith.mulf %7, %12 : vector<16x64xf32>
    %c0_8 = arith.constant 0 : index
    %c0_9 = arith.constant 0 : index
    %14 = vector.load %arg4[%c0_8, %c0_9] : memref<64x32xf32, #tpu.memory_space<vmem>>, vector<64x32xf32>
    %cst_10 = arith.constant dense<0.000000e+00> : vector<16x32xf32>
    %15 = tpu.matmul %13, %14, %cst_10 {dimension_numbers = #tpu.dot_dimension_numbers<[1], [0], [0], [1], [0, 0, 1, 1], [], []>} : vector<16x64xf32>, vector<64x32xf32>, vector<16x32xf32> -> vector<16x32xf32>
    %c0_11 = arith.constant 0 : index
    %c0_12 = arith.constant 0 : index
    %16 = vector.load %arg5[%c0_11, %c0_12] : memref<1x32xf32, #tpu.memory_space<vmem>>, vector<1x32xf32>
    %17 = vector.broadcast %16 : vector<1x32xf32> to vector<16x32xf32>
    %18 = arith.addf %15, %17 : vector<16x32xf32>
    %c0_13 = arith.constant 0 : index
    %c0_14 = arith.constant 0 : index
    %19 = vector.load %arg6[%c0_13, %c0_14] : memref<16x32xf32, #tpu.memory_space<vmem>>, vector<16x32xf32>
    tpu.vector_store %arg6[%c0_13, %c0_14], %18 {strides = array<i32>} : memref<16x32xf32, #tpu.memory_space<vmem>>, vector<16x32xf32>,
    return
  }
  func.func @transform_0(%arg0: i32) -> (i32, i32) {
    %c0_i32 = arith.constant 0 : i32
    %c0_i32_0 = arith.constant 0 : i32
    return %arg0, %c0_i32 : i32, i32
  }
  func.func @transform_1(%arg0: i32) -> (i32, i32) {
    %c0_i32 = arith.constant 0 : i32
    %c0_i32_0 = arith.constant 0 : i32
    %c0_i32_1 = arith.constant 0 : i32
    return %c0_i32, %c0_i32_0 : i32, i32
  }
  func.func @transform_2(%arg0: i32) -> (i32, i32) {
    %c0_i32 = arith.constant 0 : i32
    %c0_i32_0 = arith.constant 0 : i32
    %c0_i32_1 = arith.constant 0 : i32
    return %c0_i32, %c0_i32_0 : i32, i32
  }
  func.func @transform_3(%arg0: i32) -> (i32, i32) {
    %c0_i32 = arith.constant 0 : i32
    %c0_i32_0 = arith.constant 0 : i32
    %c0_i32_1 = arith.constant 0 : i32
    return %c0_i32, %c0_i32_0 : i32, i32
  }
  func.func @transform_4(%arg0: i32) -> (i32, i32) {
    %c0_i32 = arith.constant 0 : i32
    %c0_i32_0 = arith.constant 0 : i32
    %c0_i32_1 = arith.constant 0 : i32
    return %c0_i32, %c0_i32_0 : i32, i32
  }
  func.func @transform_5(%arg0: i32) -> (i32, i32) {
    %c0_i32 = arith.constant 0 : i32
    %c0_i32_0 = arith.constant 0 : i32
    return %arg0, %c0_i32 : i32, i32
  }
}

</mosaic_0001>

<llo_original>
// kernel: feed_forward.1
$region0: #{feed_forward.1}
  #allocation0 [shape = 'u32[]', space=smem, size = 0x4, offset = 0x4, fixed_abs, tag = 'smem constant byte address 0x4 - core index']
  #allocation1 [shape = 'u32[144,128]{1,0:T(1,128)}', space=vmem, size = 0x12000, scoped, tag = 'internal scratch']
  %s0 = inlined_call_operand.vmem [shape: f32[16,32], index: 0, kind: input, shape index: {}]
  %s1 = inlined_call_operand.vmem [shape: f32[32,64], index: 1, kind: input, shape index: {}]
  %s2 = inlined_call_operand.vmem [shape: f32[1,64], index: 2, kind: input, shape index: {}]
  %s3 = inlined_call_operand.vmem [shape: f32[64,32], index: 3, kind: input, shape index: {}]
  %s4 = inlined_call_operand.vmem [shape: f32[1,32], index: 4, kind: input, shape index: {}]
  %s5 = inlined_call_operand.hbm [shape: f32[16,32], index: 5, kind: output, shape index: {}]
  %s6 = sld [smem:[#allocation0]]
  $region30: #{feed_forward.1} parent=0
    _
  %s8 = ssub.s32 1, %s6
  %s9 = scalar_select 0, %s8, %s6
  $region1: #{feed_forward.1} parent=0
    #allocation2 [shape = 'u8[8192]{0}', space=vmem, size = 0x2000, scoped, tag = 'output window, operand 0, single buffered']
    #allocation3 [shape = 's32[1]{0}', space=sflag, size = 0x4, scoped, tag = 'scoped memory for feed_forward.1']
    %10 = vsyncpa [#allocation3], 0
    // Predicated region
    $region2: #{feed_forward.1} parent=1 // pred_check
      _
    $region3: #{feed_forward.1} parent=1 // pred_check_branch
      %12 = sbr.rel (0) target = $region5
    $region4: #{feed_forward.1} parent=1 // pred_region
      _
    $region5: #{feed_forward.1} parent=1 // pred_fallthru
      _
    // Predicated region
    $region6: #{feed_forward.1} parent=1 // pred_check
      _
    $region7: #{feed_forward.1} parent=1 // pred_check_branch
      %14 = sbr.rel (0) target = $region9
    $region8: #{feed_forward.1} parent=1 // pred_region
      _
    $region9: #{feed_forward.1} parent=1 // pred_fallthru
      _
    // Predicated region
    $region10: #{feed_forward.1} parent=1 // pred_check
      _
    $region11: #{feed_forward.1} parent=1 // pred_check_branch
      %16 = sbr.rel (0) target = $region13
    $region12: #{feed_forward.1} parent=1 // pred_region
      _
    $region13: #{feed_forward.1} parent=1 // pred_fallthru
      _
    // Predicated region
    $region14: #{feed_forward.1} parent=1 // pred_check
      _
    $region15: #{feed_forward.1} parent=1 // pred_check_branch
      %18 = sbr.rel (0) target = $region17
    $region16: #{feed_forward.1} parent=1 // pred_region
      _
    $region17: #{feed_forward.1} parent=1 // pred_fallthru
      _
    // Predicated region
    $region18: #{feed_forward.1} parent=1 // pred_check
      _
    $region19: #{feed_forward.1} parent=1 // pred_check_branch
      %20 = sbr.rel (0) target = $region21
    $region20: #{feed_forward.1} parent=1 // pred_region
      _
    $region21: #{feed_forward.1} parent=1 // pred_fallthru
      _
    %v21 = vld [vmem:[%s0] sm:$0xff]
    %v22 = vld [vmem:[%s0 + $0x8] sm:$0xff]
    %v23 = vld [vmem:[%s1] sm:$0xff]
    %v24 = vld [vmem:[%s1 + $0x8] sm:$0xff]
    %v25 = vld [vmem:[%s1 + $0x10] sm:$0xff]
    %v26 = vld [vmem:[%s1 + $0x18] sm:$0xff]
    %v27 = vld [vmem:[%s2] sm:$0x1]
    %v29 = vlaneseq
    %v30 = vshrl.u32 %v29, 7
    %v31 = vsub.s32 0, %v30
    %v32 = vrot.slane %v27, %v31
    %vm34 = vcmask 261120
    %v36 = vsel %vm34, %v21, 0
    %v39 = vsel %vm34, %v22, 0
    %41 = vmatprep.subr.mxu0 0.0
    %42 = vmatpush1.msra.mxu0 %v23
    %43 = vmatprep.subr.mxu0 0.0
    %44 = vmatpush1.msra.mxu0 %v24
    %45 = vmatprep.subr.mxu0 0.0
    %46 = vmatpush1.msra.mxu0 %v25
    %47 = vmatprep.subr.mxu0 0.0
    %48 = vmatpush1.msra.mxu0 %v26
    %49 = vmatprep.subr.mxu0 0.0
    %50 = vmatpush1.msra.mxu0 0.0
    %51 = vmatprep.subr.mxu0 0.0
    %52 = vmatpush1.msra.mxu0 0.0
    %53 = vmatprep.subr.mxu0 0.0
    %54 = vmatpush1.msra.mxu0 0.0
    %55 = vmatprep.subr.mxu0 0.0
    %56 = vmatpush1.msra.mxu0 0.0
    %57 = vmatprep.subr.mxu0 0.0
    %58 = vmatpush1.msra.mxu0 0.0
    %59 = vmatprep.subr.mxu0 0.0
    %60 = vmatpush1.msra.mxu0 0.0
    %61 = vmatprep.subr.mxu0 0.0
    %62 = vmatpush1.msra.mxu0 0.0
    %63 = vmatprep.subr.mxu0 0.0
    %64 = vmatpush1.msra.mxu0 0.0
    %65 = vmatprep.subr.mxu0 0.0
    %66 = vmatpush1.msra.mxu0 0.0
    %67 = vmatprep.subr.mxu0 0.0
    %68 = vmatpush1.msra.mxu0 0.0
    %69 = vmatprep.subr.mxu0 0.0
    %70 = vmatpush1.msra.mxu0 0.0
    %71 = vmatprep.subr.mxu0 0.0
    %72 = vmatpush1.msra.mxu0 0.0
    %73 = vmatprep.subr.mxu0 0.0
    %74 = vmatpush1.msra.mxu0 0.0
    %75 = vmatprep.subr.mxu0 0.0
    %76 = vmatpush1.msra.mxu0 0.0
    %77 = vmatprep.subr.mxu0 0.0
    %78 = vmatpush1.msra.mxu0 0.0
    %79 = vmatprep.subr.mxu0 0.0
    %80 = vmatpush1.msra.mxu0 0.0
    %81 = vmatprep.subr.mxu0 0.0
    %82 = vmatpush1.msra.mxu0 0.0
    %83 = vmatprep.subr.mxu0 0.0
    %84 = vmatpush1.msra.mxu0 0.0
    %85 = vmatprep.subr.mxu0 0.0
    %86 = vmatpush1.msra.mxu0 0.0
    %87 = vmatprep.subr.mxu0 0.0
    %88 = vmatpush1.msra.mxu0 0.0
    %89 = vmatprep.subr.mxu0 0.0
    %90 = vmatpush1.msra.mxu0 0.0
    %91 = vmatprep.subr.mxu0 0.0
    %92 = vmatpush1.msra.mxu0 0.0
    %93 = vmatprep.subr.mxu0 0.0
    %94 = vmatpush1.msra.mxu0 0.0
    %95 = vmatprep.subr.mxu0 0.0
    %96 = vmatpush1.msra.mxu0 0.0
    %97 = vmatprep.subr.mxu0 0.0
    %98 = vmatpush1.msra.mxu0 0.0
    %99 = vmatprep.subr.mxu0 0.0
    %100 = vmatpush1.msra.mxu0 0.0
    %101 = vmatprep.subr.mxu0 0.0
    %102 = vmatpush1.msra.mxu0 0.0
    %103 = vmatprep.subr.mxu0 0.0
    %104 = vmatpush1.msra.mxu0 0.0
    %105 = vmatprep.mubr.f32.mxu0 0.0
    %106 = vmatmul.mubr.f32.gmra.mrb[0].mxu0 %v36
    %v107 = vpop.f32.mrb[0].mxu0
    %v108 = vadd.f32 %v32, %v107
    %v109 = vpop.f32.mrb[0].mxu0
    %110 = vmatprep.mubr.f32.mxu0 0.0
    %111 = vmatmul.mubr.f32.gmra.mrb[0].mxu0 %v39
    %v112 = vpop.f32.mrb[0].mxu0
    %v113 = vadd.f32 %v32, %v112
    %v114 = vpop.f32.mrb[0].mxu0
    %115 = vdwg.mxu0
    %v116 = vmul.f32 %v108, 0.5
    %v117 = vmul.f32 %v113, 0.5
    %v118 = vmul.f32 %v108, 0.70710677
    %v119 = vmul.f32 %v113, 0.70710677
    %v120 = verf.f32.pop %v118
    %v121 = verf.f32.pop %v119
    %v122 = vadd.f32 %v120, 1.0
    %v123 = vadd.f32 %v121, 1.0
    %v124 = vmul.f32 %v116, %v122
    %v125 = vmul.f32 %v117, %v123
    %v126 = vld [vmem:[%s3] sm:$0xff]
    %v127 = vld [vmem:[%s3 + $0x8] sm:$0xff]
    %v128 = vld [vmem:[%s3 + $0x10] sm:$0xff]
    %v129 = vld [vmem:[%s3 + $0x18] sm:$0xff]
    %v130 = vld [vmem:[%s3 + $0x20] sm:$0xff]
    %v131 = vld [vmem:[%s3 + $0x28] sm:$0xff]
    %v132 = vld [vmem:[%s3 + $0x30] sm:$0xff]
    %v133 = vld [vmem:[%s3 + $0x38] sm:$0xff]
    %v134 = vld [vmem:[%s4] sm:$0x1]
    %v136 = vlaneseq
    %v137 = vshrl.u32 %v136, 7
    %v138 = vsub.s32 0, %v137
    %v139 = vrot.slane %v134, %v138
    %vm141 = vcmask 523264
    %v143 = vsel %vm141, %v124, 0
    %v146 = vsel %vm141, %v125, 0
    %148 = vmatprep.subr.mxu0 0.0
    %149 = vmatpush1.msra.mxu0 %v126
    %150 = vmatprep.subr.mxu0 0.0
    %151 = vmatpush1.msra.mxu0 %v127
    %152 = vmatprep.subr.mxu0 0.0
    %153 = vmatpush1.msra.mxu0 %v128
    %154 = vmatprep.subr.mxu0 0.0
    %155 = vmatpush1.msra.mxu0 %v129
    %156 = vmatprep.subr.mxu0 0.0
    %157 = vmatpush1.msra.mxu0 %v130
    %158 = vmatprep.subr.mxu0 0.0
    %159 = vmatpush1.msra.mxu0 %v131
    %160 = vmatprep.subr.mxu0 0.0
    %161 = vmatpush1.msra.mxu0 %v132
    %162 = vmatprep.subr.mxu0 0.0
    %163 = vmatpush1.msra.mxu0 %v133
    %164 = vmatprep.subr.mxu0 0.0
    %165 = vmatpush1.msra.mxu0 0.0
    %166 = vmatprep.subr.mxu0 0.0
    %167 = vmatpush1.msra.mxu0 0.0
    %168 = vmatprep.subr.mxu0 0.0
    %169 = vmatpush1.msra.mxu0 0.0
    %170 = vmatprep.subr.mxu0 0.0
    %171 = vmatpush1.msra.mxu0 0.0
    %172 = vmatprep.subr.mxu0 0.0
    %173 = vmatpush1.msra.mxu0 0.0
    %174 = vmatprep.subr.mxu0 0.0
    %175 = vmatpush1.msra.mxu0 0.0
    %176 = vmatprep.subr.mxu0 0.0
    %177 = vmatpush1.msra.mxu0 0.0
    %178 = vmatprep.subr.mxu0 0.0
    %179 = vmatpush1.msra.mxu0 0.0
    %180 = vmatprep.subr.mxu0 0.0
    %181 = vmatpush1.msra.mxu0 0.0
    %182 = vmatprep.subr.mxu0 0.0
    %183 = vmatpush1.msra.mxu0 0.0
    %184 = vmatprep.subr.mxu0 0.0
    %185 = vmatpush1.msra.mxu0 0.0
    %186 = vmatprep.subr.mxu0 0.0
    %187 = vmatpush1.msra.mxu0 0.0
    %188 = vmatprep.subr.mxu0 0.0
    %189 = vmatpush1.msra.mxu0 0.0
    %190 = vmatprep.subr.mxu0 0.0
    %191 = vmatpush1.msra.mxu0 0.0
    %192 = vmatprep.subr.mxu0 0.0
    %193 = vmatpush1.msra.mxu0 0.0
    %194 = vmatprep.subr.mxu0 0.0
    %195 = vmatpush1.msra.mxu0 0.0
    %196 = vmatprep.subr.mxu0 0.0
    %197 = vmatpush1.msra.mxu0 0.0
    %198 = vmatprep.subr.mxu0 0.0
    %199 = vmatpush1.msra.mxu0 0.0
    %200 = vmatprep.subr.mxu0 0.0
    %201 = vmatpush1.msra.mxu0 0.0
    %202 = vmatprep.subr.mxu0 0.0
    %203 = vmatpush1.msra.mxu0 0.0
    %204 = vmatprep.subr.mxu0 0.0
    %205 = vmatpush1.msra.mxu0 0.0
    %206 = vmatprep.subr.mxu0 0.0
    %207 = vmatpush1.msra.mxu0 0.0
    %208 = vmatprep.subr.mxu0 0.0
    %209 = vmatpush1.msra.mxu0 0.0
    %210 = vmatprep.subr.mxu0 0.0
    %211 = vmatpush1.msra.mxu0 0.0
    %212 = vmatprep.mubr.f32.mxu0 0.0
    %213 = vmatmul.mubr.f32.gmra.mrb[0].mxu0 %v143
    %v214 = vpop.f32.mrb[0].mxu0
    %v215 = vadd.f32 %v139, %v214
    %v216 = vpop.f32.mrb[0].mxu0
    %217 = vmatprep.mubr.f32.mxu0 0.0
    %218 = vmatmul.mubr.f32.gmra.mrb[0].mxu0 %v146
    %v219 = vpop.f32.mrb[0].mxu0
    %v220 = vadd.f32 %v139, %v219
    %v221 = vpop.f32.mrb[0].mxu0
    %222 = vdwg.mxu0
    %223 = vst.msk [vmem:[#allocation2] sm:$0xff] %vm34, %v215
    %224 = vst.msk [vmem:[#allocation2 + $0x8] sm:$0xff] %vm34, %v220
    // Predicated region
    $region22: #{feed_forward.1} parent=1 // pred_check
      _
    $region23: #{feed_forward.1} parent=1 // pred_check_branch
      %226 = sbr.rel (0) target = $region25
    $region24: #{feed_forward.1} parent=1 // pred_region
      %s228 = ssub.s32 256, 256
      %229 = vsyncadd [#allocation3], %s228
      %s230 = sshll.u32 [#allocation2], 4
      %s231 = int_to_ptr.vmem [resolvable:$true] %s230
      %236 = dma.vmem_to_hbm [thread:$0]  %s231, 256, %s5, [#allocation3], 128, 128, 8
    $region25: #{feed_forward.1} parent=1 // pred_fallthru
      _
    // Predicated region
    $region26: #{feed_forward.1} parent=1 // pred_check
      _
    $region27: #{feed_forward.1} parent=1 // pred_check_branch
      %238 = sbr.rel (0) target = $region29
    $region28: #{feed_forward.1} parent=1 // pred_region
      %239 = dma.done [#allocation3], 256
    $region29: #{feed_forward.1} parent=1 // pred_fallthru
      _
    %240 = vsyncpa [#allocation3], 1

</llo_original>
